<compile_context>
chip_gen: v7x
topology: tpu7x:2x2x1
jax: 0.10.0
libtpu: 0.0.40
codegen_flags: <defaults>
</compile_context>

<pallas_src>
import functools
import math

import jax
import jax.numpy as jnp
from jax.experimental import pallas as pl
from jax.experimental.pallas import tpu as pltpu

_LANE = 128
_TILE_GRANULE = 1 << 20            # 1 MiB
_MAX_TILE_BYTES = 8 << 20          # per-buffer cap (v5e/v6e regime)
_SMALL_FASTPATH_BYTES = 128 << 10  # below this, plain XLA add is at roofline


# ------------------------------ kernels -------------------------------------


def _add_kernel(a_ref, b_ref, o_ref):
    out_dtype = o_ref.dtype
    # In-kernel promotion: the cast is a VPU op hidden under the HBM pipeline.
    o_ref[...] = a_ref[...].astype(out_dtype) + b_ref[...].astype(out_dtype)


def _add_scalar_kernel(a_ref, s_ref, o_ref):
    out_dtype = o_ref.dtype
    # s_ref is a (1, 1) block pinned to block (0, 0); broadcast in-kernel.
    o_ref[...] = a_ref[...].astype(out_dtype) + s_ref[...].astype(out_dtype)


# ------------------------------ helpers --------------------------------------


def _round_up(x, m):
    return ((x + m - 1) // m) * m


def _sublane_multiple(itemsize):
    return {4: 8, 2: 16, 1: 32}.get(itemsize, 8)


def _choose_lane_width(total):
    # Largest lane-dense width (multiple of 128) that divides `total` exactly.
    for c in (4096, 2048, 1024, 512, 256, 128):
        if total % c == 0:
            return c
    return None


@functools.lru_cache(maxsize=None)
def _vmem_budget():
    """(per_buffer_tile_bytes, vmem_limit_bytes) sized for the local chip."""
    try:
        vmem_cap = int(pltpu.get_tpu_info().vmem_capacity_bytes)
    except Exception:
        vmem_cap = 64 << 20  # conservative default: v7x has the smallest VMEM
    # Resident footprint ~ 6x per-buffer tile (3 operands x double buffer).
    footprint = min(vmem_cap // 2, 48 << 20)
    tile = max(_TILE_GRANULE, (footprint // 6) // _TILE_GRANULE * _TILE_GRANULE)
    tile = min(tile, _MAX_TILE_BYTES)
    vmem_limit = min(vmem_cap - (8 << 20), footprint + (16 << 20))
    return tile, vmem_limit


def _row_tiling(R, C, itemsizes):
    """Row tile size, number of row blocks, and vmem limit for an (R, C) slab."""
    sublane = max(_sublane_multiple(s) for s in itemsizes)
    tile_bytes, vmem_limit = _vmem_budget()
    rows_budget = max(1, tile_bytes // (C * max(itemsizes)))
    if R <= sublane:
        tr = R                          # tiny slab: one full-dim block
    elif rows_budget >= R:
        # Fits in one tile, but still emit >= 2 row tiles so the "parallel"
        # axis can shard across v7x's two TensorCores.
        tr = _round_up(pl.cdiv(R, 2), sublane)
    else:
        tr = max(sublane, (rows_budget // sublane) * sublane)
    return tr, pl.cdiv(R, tr), vmem_limit


def _add_same_shape(a_flat, b_flat, out_dtype):
    """Pallas add for flat, equal-length arrays; len must be a multiple of 128."""
    total = int(a_flat.shape[0])
    C = _choose_lane_width(total)
    R = total // C
    itemsizes = (a_flat.dtype.itemsize, b_flat.dtype.itemsize,
                 jnp.dtype(out_dtype).itemsize)
    tr, nblk, vmem_limit = _row_tiling(R, C, itemsizes)
    a2 = a_flat.reshape(R, C)
    b2 = b_flat.reshape(R, C)
    out2 = pl.pallas_call(
        _add_kernel,
        out_shape=jax.ShapeDtypeStruct((R, C), out_dtype),
        grid_spec=pltpu.PrefetchScalarGridSpec(
            num_scalar_prefetch=0,
            grid=(nblk,),
            in_specs=[
                pl.BlockSpec((tr, C), lambda i: (i, 0)),
                pl.BlockSpec((tr, C), lambda i: (i, 0)),
            ],
            out_specs=pl.BlockSpec((tr, C), lambda i: (i, 0)),
        ),
        compiler_params=pltpu.CompilerParams(
            dimension_semantics=("parallel",),
            vmem_limit_bytes=vmem_limit,
        ),
        cost_estimate=pl.CostEstimate(
            flops=total, transcendentals=0,
            bytes_accessed=total * sum(itemsizes)),
    )(a2, b2)
    return out2.reshape(-1)


def _add_scalar(big_flat, scalar, out_dtype):
    """Pallas add of a flat array with a single (pinned) scalar operand."""
    total = int(big_flat.shape[0])
    C = _choose_lane_width(total)
    R = total // C
    itemsizes = (big_flat.dtype.itemsize, jnp.dtype(out_dtype).itemsize)
    tr, nblk, vmem_limit = _row_tiling(R, C, itemsizes)
    big2 = big_flat.reshape(R, C)
    s2 = scalar.reshape(1, 1)
    out2 = pl.pallas_call(
        _add_scalar_kernel,
        out_shape=jax.ShapeDtypeStruct((R, C), out_dtype),
        grid_spec=pltpu.PrefetchScalarGridSpec(
            num_scalar_prefetch=0,
            grid=(nblk,),
            in_specs=[
                pl.BlockSpec((tr, C), lambda i: (i, 0)),
                pl.BlockSpec((1, 1), lambda i: (0, 0)),
            ],
            out_specs=pl.BlockSpec((tr, C), lambda i: (i, 0)),
        ),
        compiler_params=pltpu.CompilerParams(
            dimension_semantics=("parallel",),
            vmem_limit_bytes=vmem_limit,
        ),
        cost_estimate=pl.CostEstimate(
            flops=total, transcendentals=0,
            bytes_accessed=total * sum(itemsizes)),
    )(big2, s2)
    return out2.reshape(-1)


# ------------------------------ public API ------------------------------------


def pallas_add(a: jax.Array, b: jax.Array) -> jax.Array:
    """Elementwise a + b (PyTorch `Add.forward`)."""
    a = jnp.asarray(a)
    b = jnp.asarray(b)
    # TODO(synk): jnp.result_type under x64-disabled JAX demotes 64-bit inputs
    # and differs from torch in a couple of mixed int/float promotion corners.
    out_dtype = jnp.result_type(a, b)
    out_shape = jnp.broadcast_shapes(a.shape, b.shape)
    total = math.prod(out_shape) if out_shape else 1

    if total == 0:
        return jnp.zeros(out_shape, out_dtype)

    # Tiny-input fast path: XLA's fused elementwise add is already at roofline.
    if total * jnp.dtype(out_dtype).itemsize <= _SMALL_FASTPATH_BYTES:
        return (a + b).astype(out_dtype)

    # Scalar broadcast: keep the big operand un-copied, pin the scalar in-kernel.
    if a.size == 1 or b.size == 1:
        big, small = (a, b) if b.size == 1 else (b, a)
        if big.size == total:
            big_flat = big.reshape(-1)
            small_flat = small.reshape(-1)
            if total % _LANE == 0:
                out_flat = _add_scalar(big_flat, small_flat, out_dtype)
            else:
                prefix = (total // _LANE) * _LANE
                head = _add_scalar(big_flat[:prefix], small_flat, out_dtype)
                tail = (big_flat[prefix:].astype(out_dtype)
                        + small_flat.astype(out_dtype)[0])
                out_flat = jnp.concatenate([head, tail])
            return out_flat.reshape(out_shape)

    # General case. Same-shape is the main path; non-scalar broadcasting falls
    # back to materialization.
    # TODO(synk): general (non-scalar) broadcasting still materializes the
    # expanded operand in HBM; a pinned-dim BlockSpec could avoid that copy.
    if a.shape != out_shape or b.shape != out_shape:
        a, b = jnp.broadcast_arrays(a, b)
    a_flat = a.reshape(-1)
    b_flat = b.reshape(-1)
    if total % _LANE == 0:
        out_flat = _add_same_shape(a_flat, b_flat, out_dtype)
    else:
        # Ragged: Pallas handles the 128-aligned prefix, jnp handles the tail.
        prefix = (total // _LANE) * _LANE
        head = _add_same_shape(a_flat[:prefix], b_flat[:prefix], out_dtype)
        tail = a_flat[prefix:].astype(out_dtype) + b_flat[prefix:].astype(out_dtype)
        out_flat = jnp.concatenate([head, tail])
    return out_flat.reshape(out_shape)


# ------------------------------ test ------------------------------------------


if __name__ == "__main__":
    key = jax.random.PRNGKey(0)
    ka, kb, kc, kd = jax.random.split(key, 4)

    # Main path: 256 KiB/operand, lane-dense slab, >= 2 row tiles.
    a = jax.random.normal(ka, (2, 4, 64, 128), dtype=jnp.float32)
    b = jax.random.normal(kb, (2, 4, 64, 128), dtype=jnp.float32)
    out = pallas_add(a, b)
    jax.block_until_ready(out)
    ref = a + b
    assert out.shape == ref.shape and out.dtype == ref.dtype
    assert jnp.allclose(out, ref, atol=1e-6, rtol=1e-6)

    # Mixed dtype (in-kernel promotion): bf16 + f32 -> f32.
    a16 = a.astype(jnp.bfloat16)
    out2 = pallas_add(a16, b)
    ref2 = a16 + b
    assert out2.dtype == ref2.dtype
    assert jnp.allclose(out2, ref2, atol=1e-5, rtol=1e-5)

    # Scalar broadcast handled in-kernel (no broadcast_arrays materialization).
    s = jnp.float32(1.5)
    out3 = pallas_add(a, s)
    assert jnp.allclose(out3, a + s, atol=1e-6, rtol=1e-6)

    # Tiny-input XLA fast path.
    ta = jax.random.normal(kc, (2, 4, 16, 16), dtype=jnp.float32)
    tb = jax.random.normal(kd, (2, 4, 16, 16), dtype=jnp.float32)
    assert jnp.allclose(pallas_add(ta, tb), ta + tb, atol=1e-6, rtol=1e-6)

    # Ragged element count (Pallas prefix + jnp tail).
    ra = jax.random.normal(kc, (40007,), dtype=jnp.float32)
    rb = jax.random.normal(kd, (40007,), dtype=jnp.float32)
    assert jnp.allclose(pallas_add(ra, rb), ra + rb, atol=1e-6, rtol=1e-6)

    print("KERNEL_OK")
</pallas_src>

<mosaic_0001>
module attributes {stable_mosaic.version = 11 : i64} {
  func.func @_add_kernel(%arg0: i32, %arg1: memref<8x4096xf32, #tpu.memory_space<vmem>>, %arg2: memref<8x4096xf32, #tpu.memory_space<vmem>>, %arg3: memref<8x4096xf32, #tpu.memory_space<vmem>>) attributes {dimension_semantics = [#tpu.dimension_semantics<parallel>], iteration_bounds = array<i64: 2>, scalar_prefetch = 0 : i64, scratch_operands = 0 : i64, tpu.core_type = #tpu.core_type<tc>, window_params = [{transform_indices = @transform_0, window_bounds = array<i64: 8, 4096>}, {transform_indices = @transform_1, window_bounds = array<i64: 8, 4096>}, {transform_indices = @transform_2, window_bounds = array<i64: 8, 4096>}]} {
    %c0 = arith.constant 0 : index
    %c0_0 = arith.constant 0 : index
    %0 = vector.load %arg1[%c0, %c0_0] : memref<8x4096xf32, #tpu.memory_space<vmem>>, vector<8x4096xf32>
    %c0_1 = arith.constant 0 : index
    %c0_2 = arith.constant 0 : index
    %1 = vector.load %arg2[%c0_1, %c0_2] : memref<8x4096xf32, #tpu.memory_space<vmem>>, vector<8x4096xf32>
    %2 = arith.addf %0, %1 : vector<8x4096xf32>
    %c0_3 = arith.constant 0 : index
    %c0_4 = arith.constant 0 : index
    %3 = vector.load %arg3[%c0_3, %c0_4] : memref<8x4096xf32, #tpu.memory_space<vmem>>, vector<8x4096xf32>
    tpu.vector_store %arg3[%c0_3, %c0_4], %2 {strides = array<i32>} : memref<8x4096xf32, #tpu.memory_space<vmem>>, vector<8x4096xf32>,
    return
  }
  func.func @transform_0(%arg0: i32) -> (i32, i32) {
    %c0_i32 = arith.constant 0 : i32
    %c0_i32_0 = arith.constant 0 : i32
    return %arg0, %c0_i32 : i32, i32
  }
  func.func @transform_1(%arg0: i32) -> (i32, i32) {
    %c0_i32 = arith.constant 0 : i32
    %c0_i32_0 = arith.constant 0 : i32
    return %arg0, %c0_i32 : i32, i32
  }
  func.func @transform_2(%arg0: i32) -> (i32, i32) {
    %c0_i32 = arith.constant 0 : i32
    %c0_i32_0 = arith.constant 0 : i32
    return %arg0, %c0_i32 : i32, i32
  }
}

</mosaic_0001>

<llo_original>
// kernel: tpu_custom_call.1
$region0: #{tpu_custom_call.1}
  #allocation0 [shape = 'u32[]', space=smem, size = 0x4, offset = 0x4, fixed_abs, tag = 'smem constant byte address 0x4 - core index']
  #allocation1 [shape = 'u32[144,128]{1,0:T(1,128)}', space=vmem, size = 0x12000, scoped, tag = 'internal scratch']
  %s0 = inlined_call_operand.hbm [shape: f32[16,4096], index: 0, kind: input, shape index: {}]
  %s1 = inlined_call_operand.hbm [shape: f32[16,4096], index: 1, kind: input, shape index: {}]
  %s2 = inlined_call_operand.hbm [shape: f32[16,4096], index: 2, kind: output, shape index: {}]
  %s3 = sld [smem:[#allocation0]]
  $region49: #{tpu_custom_call.1} parent=0
    _
  %s5 = ssub.s32 1, %s3
  %s6 = scalar_select 0, %s5, %s3
  $region1: #{tpu_custom_call.1} parent=0
    #allocation2 [shape = 'u8[262144]{0}', space=vmem, size = 0x40000, scoped, tag = 'input window, operand 0']
    #allocation3 [shape = 's32[2]{0}', space=sflag, size = 0x8, scoped, tag = 'scoped memory for tpu_custom_call.1']
    #allocation4 [shape = 's32[2]{0}', space=sflag, size = 0x8, scoped, tag = 'scoped memory for tpu_custom_call.1']
    #allocation5 [shape = 'u8[262144]{0}', space=vmem, size = 0x40000, scoped, tag = 'input window, operand 1']
    #allocation6 [shape = 's32[2]{0}', space=sflag, size = 0x8, scoped, tag = 'scoped memory for tpu_custom_call.1']
    #allocation7 [shape = 'u8[262144]{0}', space=vmem, size = 0x40000, scoped, tag = 'output window, operand 0']
    %7 = vsyncpa [#allocation3], 0
    %s8 = scalar_lea.sflag [#allocation3], 1
    %9 = vsyncpa %s8, 0
    %10 = vsyncpa [#allocation6], 0
    %s11 = scalar_lea.sflag [#allocation6], 1
    %12 = vsyncpa %s11, 0
    %13 = vsyncpa [#allocation4], 0
    %s14 = scalar_lea.sflag [#allocation4], 1
    %15 = vsyncpa %s14, 0
    loop: start=0, step=1, limit=4
    $region2: #{tpu_custom_call.1} parent=1 // loop_pre_header
      _
    $region3: #{tpu_custom_call.1} parent=1 // loop_header
      %s17 = sphi 0, %s21
      %p18 = scmp.ge.s32.totalorder %s17, 4
      %s27 = sphi 0, %s29
      %s30 = sphi 0, %s27
      %s31 = sphi 0, %s30
      %s47 = sphi 0, %s31
      %s53 = sphi 0, %s55
      %s56 = sphi 0, %s53
      %s57 = sphi 0, %s56
      %s73 = sphi 0, %s57
      %s79 = sphi 0, %s81
      %s82 = sphi 0, %s79
      %s83 = sphi 0, %s82
      %s99 = sphi 0, %s83
    $region4: #{tpu_custom_call.1} parent=1 // loop_header_branch
      %20 = sbr.rel (%p18) target = $region8
    $region5: #{tpu_custom_call.1} parent=1 // loop_body
      %s22 = ssub.s32 %s17, 1
      %s23 = ssub.s32 %s17, 2
      %s24 = sadd.s32 %s17, 1
      %s25 = ssub.s32 %s17, %s24
      %p26 = scmp.eq.s32.totalorder %s25, 0
      %s28 = sadd.s32 %s27, 1
      %s29 = scalar_select %p26, %s27, %s28
      %p32 = pneg %p26
      %p33 = scmp.eq.s32.totalorder %s17, 1
      %p34 = por %p32, %p33
      %p35 = scmp.ne.s32.totalorder %s27, %s30
      %p36 = scmp.eq.s32.totalorder %s17, 0
      %p37 = por %p35, %p36
      %p38 = scmp.ne.s32.totalorder %s27, %s30
      %p39 = scmp.eq.s32.totalorder %s22, 1
      %p40 = por %p38, %p39
      %p41 = scmp.ne.s32.totalorder %s30, %s31
      %p42 = scmp.eq.s32.totalorder %s22, 0
      %p43 = por %p41, %p42
      %p44 = scmp.ne.s32.totalorder %s30, %s31
      %p45 = scmp.eq.s32.totalorder %s23, 1
      %p46 = por %p44, %p45
      %p48 = scmp.ne.s32.totalorder %s31, %s47
      %p49 = scmp.eq.s32.totalorder %s23, 0
      %p50 = por %p48, %p49
      %s51 = ssub.s32 %s17, %s24
      %p52 = scmp.eq.s32.totalorder %s51, 0
      %s54 = sadd.s32 %s53, 1
      %s55 = scalar_select %p52, %s53, %s54
      %p58 = pneg %p52
      %p59 = scmp.eq.s32.totalorder %s17, 1
      %p60 = por %p58, %p59
      %p61 = scmp.ne.s32.totalorder %s53, %s56
      %p62 = scmp.eq.s32.totalorder %s17, 0
      %p63 = por %p61, %p62
      %p64 = scmp.ne.s32.totalorder %s53, %s56
      %p65 = scmp.eq.s32.totalorder %s22, 1
      %p66 = por %p64, %p65
      %p67 = scmp.ne.s32.totalorder %s56, %s57
      %p68 = scmp.eq.s32.totalorder %s22, 0
      %p69 = por %p67, %p68
      %p70 = scmp.ne.s32.totalorder %s56, %s57
      %p71 = scmp.eq.s32.totalorder %s23, 1
      %p72 = por %p70, %p71
      %p74 = scmp.ne.s32.totalorder %s57, %s73
      %p75 = scmp.eq.s32.totalorder %s23, 0
      %p76 = por %p74, %p75
      %s77 = ssub.s32 %s17, %s24
      %p78 = scmp.eq.s32.totalorder %s77, 0
      %s80 = sadd.s32 %s79, 1
      %s81 = scalar_select %p78, %s79, %s80
      %p84 = pneg %p78
      %p85 = scmp.eq.s32.totalorder %s17, 1
      %p86 = por %p84, %p85
      %p87 = scmp.ne.s32.totalorder %s79, %s82
      %p88 = scmp.eq.s32.totalorder %s17, 0
      %p89 = por %p87, %p88
      %p90 = scmp.ne.s32.totalorder %s79, %s82
      %p91 = scmp.eq.s32.totalorder %s22, 1
      %p92 = por %p90, %p91
      %p93 = scmp.ne.s32.totalorder %s82, %s83
      %p94 = scmp.eq.s32.totalorder %s22, 0
      %p95 = por %p93, %p94
      %p96 = scmp.ne.s32.totalorder %s82, %s83
      %p97 = scmp.eq.s32.totalorder %s23, 1
      %p98 = por %p96, %p97
      %p100 = scmp.ne.s32.totalorder %s83, %s99
      %p101 = scmp.eq.s32.totalorder %s23, 0
      %p102 = por %p100, %p101
      %p103 = scmp.le.s32.totalorder 1, %s17
      %p104 = scmp.lt.s32.totalorder %s17, 3
      %p105 = pnand %p103, %p104
      %p106 = pneg %p105
      // Predicated region
      $region9: #{tpu_custom_call.1} parent=5 // pred_check
        _
      $region10: #{tpu_custom_call.1} parent=5 // pred_check_branch
        %108 = sbr.rel (%p105) target = $region12
      $region11: #{tpu_custom_call.1} parent=5 // pred_region
        %s109 = ssub.s32 %s17, 1
      $region12: #{tpu_custom_call.1} parent=5 // pred_fallthru
        _
      %p110 = scmp.lt.s32.totalorder %s17, 2
      // Predicated region
      $region13: #{tpu_custom_call.1} parent=5 // pred_check
        %p111 = pneg %p110
      $region14: #{tpu_custom_call.1} parent=5 // pred_check_branch
        %113 = sbr.rel (%p111) target = $region16
      $region15: #{tpu_custom_call.1} parent=5 // pred_region
        // Predicated region
        $region17: #{tpu_custom_call.1} parent=15 // pred_check
          %p114 = pneg %p37
        $region18: #{tpu_custom_call.1} parent=15 // pred_check_branch
          %116 = sbr.rel (%p114) target = $region20
        $region19: #{tpu_custom_call.1} parent=15 // pred_region
          %s117 = sand.u32 %s27, 1
          %s118 = scalar_lea.sflag [#allocation3], %s117
          %s119 = sand.u32 %s27, 1
          %s120 = smul.addr %s119, 256
          %s121 = scalar_lea.vmem [#allocation2], %s120
          %s123 = ssub.s32 4096, 4096
          %124 = vsyncadd %s118, %s123
          %s125 = smul.addr %s17, 32
          %s126 = smul.addr %s125, 128
          %s127 = scalar_lea.hbm %s0, %s126
          %s129 = sshll.u32 %s121, 4
          %s130 = int_to_ptr.vmem [resolvable:$true] %s129
          %132 = dma.hbm_to_vmem [thread:$0]  %s127, 4096, %s130, %s118
        $region20: #{tpu_custom_call.1} parent=15 // pred_fallthru
          _
        // Predicated region
        $region21: #{tpu_custom_call.1} parent=15 // pred_check
          %p133 = pneg %p63
        $region22: #{tpu_custom_call.1} parent=15 // pred_check_branch
          %135 = sbr.rel (%p133) target = $region24
        $region23: #{tpu_custom_call.1} parent=15 // pred_region
          %s136 = sand.u32 %s53, 1
          %s137 = scalar_lea.sflag [#allocation6], %s136
          %s138 = sand.u32 %s53, 1
          %s139 = smul.addr %s138, 256
          %s140 = scalar_lea.vmem [#allocation5], %s139
          %s142 = ssub.s32 4096, 4096
          %143 = vsyncadd %s137, %s142
          %s144 = smul.addr %s17, 32
          %s145 = smul.addr %s144, 128
          %s146 = scalar_lea.hbm %s1, %s145
          %s148 = sshll.u32 %s140, 4
          %s149 = int_to_ptr.vmem [resolvable:$true] %s148
          %151 = dma.hbm_to_vmem [thread:$0]  %s146, 4096, %s149, %s137
        $region24: #{tpu_custom_call.1} parent=15 // pred_fallthru
          _
      $region16: #{tpu_custom_call.1} parent=5 // pred_fallthru
        _
      %p152 = scmp.le.s32.totalorder 1, %s17
      %p153 = scmp.lt.s32.totalorder %s17, 3
      %p154 = pnand %p152, %p153
      %p155 = pneg %p154
      // Predicated region
      $region25: #{tpu_custom_call.1} parent=5 // pred_check
        _
      $region26: #{tpu_custom_call.1} parent=5 // pred_check_branch
        %157 = sbr.rel (%p154) target = $region28
      $region27: #{tpu_custom_call.1} parent=5 // pred_region
        %s158 = ssub.s32 %s17, 1
        %s159 = sand.u32 %s30, 1
        %s160 = scalar_lea.sflag [#allocation3], %s159
        %s161 = sand.u32 %s30, 1
        %s162 = smul.addr %s161, 256
        %s163 = scalar_lea.vmem [#allocation2], %s162
        // Predicated region
        $region29: #{tpu_custom_call.1} parent=27 // pred_check
          %p164 = pneg %p43
        $region30: #{tpu_custom_call.1} parent=27 // pred_check_branch
          %166 = sbr.rel (%p164) target = $region32
        $region31: #{tpu_custom_call.1} parent=27 // pred_region
          %167 = dma.done %s160, 4096
        $region32: #{tpu_custom_call.1} parent=27 // pred_fallthru
          _
        %s168 = sand.u32 %s56, 1
        %s169 = scalar_lea.sflag [#allocation6], %s168
        %s170 = sand.u32 %s56, 1
        %s171 = smul.addr %s170, 256
        %s172 = scalar_lea.vmem [#allocation5], %s171
        // Predicated region
        $region33: #{tpu_custom_call.1} parent=27 // pred_check
          %p173 = pneg %p69
        $region34: #{tpu_custom_call.1} parent=27 // pred_check_branch
          %175 = sbr.rel (%p173) target = $region36
        $region35: #{tpu_custom_call.1} parent=27 // pred_region
          %176 = dma.done %s169, 4096
        $region36: #{tpu_custom_call.1} parent=27 // pred_fallthru
          _
        %s177 = sand.u32 %s30, 1
        %s178 = scalar_lea.sflag [#allocation3], %s177
        %s179 = sand.u32 %s30, 1
        %s180 = smul.addr %s179, 256
        %s181 = scalar_lea.vmem [#allocation2], %s180
        %p182 = pneg %p43
        %p183 = pneg %p40
        %s184 = sand.u32 %s56, 1
        %s185 = scalar_lea.sflag [#allocation6], %s184
        %s186 = sand.u32 %s56, 1
        %s187 = smul.addr %s186, 256
        %s188 = scalar_lea.vmem [#allocation5], %s187
        %p189 = pneg %p69
        %p190 = pneg %p66
        %p191 = pneg %p95
        %p192 = pneg %p92
        %s193 = sand.u32 %s82, 1
        %s194 = scalar_lea.sflag [#allocation4], %s193
        %s195 = sand.u32 %s82, 1
        %s196 = smul.addr %s195, 256
        %s197 = scalar_lea.vmem [#allocation7], %s196
        %v198 = vld [vmem:[%s163] sm:$0xff]
        %v199 = vld [vmem:[%s163 + $0x8] sm:$0xff]
        %v200 = vld [vmem:[%s163 + $0x10] sm:$0xff]
        %v201 = vld [vmem:[%s163 + $0x18] sm:$0xff]
        %v202 = vld [vmem:[%s163 + $0x20] sm:$0xff]
        %v203 = vld [vmem:[%s163 + $0x28] sm:$0xff]
        %v204 = vld [vmem:[%s163 + $0x30] sm:$0xff]
        %v205 = vld [vmem:[%s163 + $0x38] sm:$0xff]
        %v206 = vld [vmem:[%s163 + $0x40] sm:$0xff]
        %v207 = vld [vmem:[%s163 + $0x48] sm:$0xff]
        %v208 = vld [vmem:[%s163 + $0x50] sm:$0xff]
        %v209 = vld [vmem:[%s163 + $0x58] sm:$0xff]
        %v210 = vld [vmem:[%s163 + $0x60] sm:$0xff]
        %v211 = vld [vmem:[%s163 + $0x68] sm:$0xff]
        %v212 = vld [vmem:[%s163 + $0x70] sm:$0xff]
        %v213 = vld [vmem:[%s163 + $0x78] sm:$0xff]
        %v214 = vld [vmem:[%s163 + $0x80] sm:$0xff]
        %v215 = vld [vmem:[%s163 + $0x88] sm:$0xff]
        %v216 = vld [vmem:[%s163 + $0x90] sm:$0xff]
        %v217 = vld [vmem:[%s163 + $0x98] sm:$0xff]
        %v218 = vld [vmem:[%s163 + $0xa0] sm:$0xff]
        %v219 = vld [vmem:[%s163 + $0xa8] sm:$0xff]
        %v220 = vld [vmem:[%s163 + $0xb0] sm:$0xff]
        %v221 = vld [vmem:[%s163 + $0xb8] sm:$0xff]
        %v222 = vld [vmem:[%s163 + $0xc0] sm:$0xff]
        %v223 = vld [vmem:[%s163 + $0xc8] sm:$0xff]
        %v224 = vld [vmem:[%s163 + $0xd0] sm:$0xff]
        %v225 = vld [vmem:[%s163 + $0xd8] sm:$0xff]
        %v226 = vld [vmem:[%s163 + $0xe0] sm:$0xff]
        %v227 = vld [vmem:[%s163 + $0xe8] sm:$0xff]
        %v228 = vld [vmem:[%s163 + $0xf0] sm:$0xff]
        %v229 = vld [vmem:[%s163 + $0xf8] sm:$0xff]
        %v230 = vld [vmem:[%s172] sm:$0xff]
        %v231 = vld [vmem:[%s172 + $0x8] sm:$0xff]
        %v232 = vld [vmem:[%s172 + $0x10] sm:$0xff]
        %v233 = vld [vmem:[%s172 + $0x18] sm:$0xff]
        %v234 = vld [vmem:[%s172 + $0x20] sm:$0xff]
        %v235 = vld [vmem:[%s172 + $0x28] sm:$0xff]
        %v236 = vld [vmem:[%s172 + $0x30] sm:$0xff]
        %v237 = vld [vmem:[%s172 + $0x38] sm:$0xff]
        %v238 = vld [vmem:[%s172 + $0x40] sm:$0xff]
        %v239 = vld [vmem:[%s172 + $0x48] sm:$0xff]
        %v240 = vld [vmem:[%s172 + $0x50] sm:$0xff]
        %v241 = vld [vmem:[%s172 + $0x58] sm:$0xff]
        %v242 = vld [vmem:[%s172 + $0x60] sm:$0xff]
        %v243 = vld [vmem:[%s172 + $0x68] sm:$0xff]
        %v244 = vld [vmem:[%s172 + $0x70] sm:$0xff]
        %v245 = vld [vmem:[%s172 + $0x78] sm:$0xff]
        %v246 = vld [vmem:[%s172 + $0x80] sm:$0xff]
        %v247 = vld [vmem:[%s172 + $0x88] sm:$0xff]
        %v248 = vld [vmem:[%s172 + $0x90] sm:$0xff]
        %v249 = vld [vmem:[%s172 + $0x98] sm:$0xff]
        %v250 = vld [vmem:[%s172 + $0xa0] sm:$0xff]
        %v251 = vld [vmem:[%s172 + $0xa8] sm:$0xff]
        %v252 = vld [vmem:[%s172 + $0xb0] sm:$0xff]
        %v253 = vld [vmem:[%s172 + $0xb8] sm:$0xff]
        %v254 = vld [vmem:[%s172 + $0xc0] sm:$0xff]
        %v255 = vld [vmem:[%s172 + $0xc8] sm:$0xff]
        %v256 = vld [vmem:[%s172 + $0xd0] sm:$0xff]
        %v257 = vld [vmem:[%s172 + $0xd8] sm:$0xff]
        %v258 = vld [vmem:[%s172 + $0xe0] sm:$0xff]
        %v259 = vld [vmem:[%s172 + $0xe8] sm:$0xff]
        %v260 = vld [vmem:[%s172 + $0xf0] sm:$0xff]
        %v261 = vld [vmem:[%s172 + $0xf8] sm:$0xff]
        %v262 = vadd.f32 %v198, %v230
        %v263 = vadd.f32 %v199, %v231
        %v264 = vadd.f32 %v200, %v232
        %v265 = vadd.f32 %v201, %v233
        %v266 = vadd.f32 %v202, %v234
        %v267 = vadd.f32 %v203, %v235
        %v268 = vadd.f32 %v204, %v236
        %v269 = vadd.f32 %v205, %v237
        %v270 = vadd.f32 %v206, %v238
        %v271 = vadd.f32 %v207, %v239
        %v272 = vadd.f32 %v208, %v240
        %v273 = vadd.f32 %v209, %v241
        %v274 = vadd.f32 %v210, %v242
        %v275 = vadd.f32 %v211, %v243
        %v276 = vadd.f32 %v212, %v244
        %v277 = vadd.f32 %v213, %v245
        %v278 = vadd.f32 %v214, %v246
        %v279 = vadd.f32 %v215, %v247
        %v280 = vadd.f32 %v216, %v248
        %v281 = vadd.f32 %v217, %v249
        %v282 = vadd.f32 %v218, %v250
        %v283 = vadd.f32 %v219, %v251
        %v284 = vadd.f32 %v220, %v252
        %v285 = vadd.f32 %v221, %v253
        %v286 = vadd.f32 %v222, %v254
        %v287 = vadd.f32 %v223, %v255
        %v288 = vadd.f32 %v224, %v256
        %v289 = vadd.f32 %v225, %v257
        %v290 = vadd.f32 %v226, %v258
        %v291 = vadd.f32 %v227, %v259
        %v292 = vadd.f32 %v228, %v260
        %v293 = vadd.f32 %v229, %v261
        %294 = vst [vmem:[%s197] sm:$0xff] %v262
        %295 = vst [vmem:[%s197 + $0x8] sm:$0xff] %v263
        %296 = vst [vmem:[%s197 + $0x10] sm:$0xff] %v264
        %297 = vst [vmem:[%s197 + $0x18] sm:$0xff] %v265
        %298 = vst [vmem:[%s197 + $0x20] sm:$0xff] %v266
        %299 = vst [vmem:[%s197 + $0x28] sm:$0xff] %v267
        %300 = vst [vmem:[%s197 + $0x30] sm:$0xff] %v268
        %301 = vst [vmem:[%s197 + $0x38] sm:$0xff] %v269
        %302 = vst [vmem:[%s197 + $0x40] sm:$0xff] %v270
        %303 = vst [vmem:[%s197 + $0x48] sm:$0xff] %v271
        %304 = vst [vmem:[%s197 + $0x50] sm:$0xff] %v272
        %305 = vst [vmem:[%s197 + $0x58] sm:$0xff] %v273
        %306 = vst [vmem:[%s197 + $0x60] sm:$0xff] %v274
        %307 = vst [vmem:[%s197 + $0x68] sm:$0xff] %v275
        %308 = vst [vmem:[%s197 + $0x70] sm:$0xff] %v276
        %309 = vst [vmem:[%s197 + $0x78] sm:$0xff] %v277
        %310 = vst [vmem:[%s197 + $0x80] sm:$0xff] %v278
        %311 = vst [vmem:[%s197 + $0x88] sm:$0xff] %v279
        %312 = vst [vmem:[%s197 + $0x90] sm:$0xff] %v280
        %313 = vst [vmem:[%s197 + $0x98] sm:$0xff] %v281
        %314 = vst [vmem:[%s197 + $0xa0] sm:$0xff] %v282
        %315 = vst [vmem:[%s197 + $0xa8] sm:$0xff] %v283
        %316 = vst [vmem:[%s197 + $0xb0] sm:$0xff] %v284
        %317 = vst [vmem:[%s197 + $0xb8] sm:$0xff] %v285
        %318 = vst [vmem:[%s197 + $0xc0] sm:$0xff] %v286
        %319 = vst [vmem:[%s197 + $0xc8] sm:$0xff] %v287
        %320 = vst [vmem:[%s197 + $0xd0] sm:$0xff] %v288
        %321 = vst [vmem:[%s197 + $0xd8] sm:$0xff] %v289
        %322 = vst [vmem:[%s197 + $0xe0] sm:$0xff] %v290
        %323 = vst [vmem:[%s197 + $0xe8] sm:$0xff] %v291
        %324 = vst [vmem:[%s197 + $0xf0] sm:$0xff] %v292
        %325 = vst [vmem:[%s197 + $0xf8] sm:$0xff] %v293
        %s326 = sand.u32 %s82, 1
        %s327 = scalar_lea.sflag [#allocation4], %s326
        %s328 = sand.u32 %s82, 1
        %s329 = smul.addr %s328, 256
        %s330 = scalar_lea.vmem [#allocation7], %s329
        // Predicated region
        $region37: #{tpu_custom_call.1} parent=27 // pred_check
          %p331 = pneg %p92
        $region38: #{tpu_custom_call.1} parent=27 // pred_check_branch
          %333 = sbr.rel (%p331) target = $region40
        $region39: #{tpu_custom_call.1} parent=27 // pred_region
          %s335 = ssub.s32 4096, 4096
          %336 = vsyncadd %s327, %s335
          %s337 = smul.addr %s22, 32
          %s338 = smul.addr %s337, 128
          %s339 = scalar_lea.hbm %s2, %s338
          %s341 = sshll.u32 %s330, 4
          %s342 = int_to_ptr.vmem [resolvable:$true] %s341
          %344 = dma.vmem_to_hbm [thread:$0]  %s342, 4096, %s339, %s327
        $region40: #{tpu_custom_call.1} parent=27 // pred_fallthru
          _
      $region28: #{tpu_custom_call.1} parent=5 // pred_fallthru
        _
      %p345 = scmp.le.s32.totalorder 2, %s17
      // Predicated region
      $region41: #{tpu_custom_call.1} parent=5 // pred_check
        %p346 = pneg %p345
      $region42: #{tpu_custom_call.1} parent=5 // pred_check_branch
        %348 = sbr.rel (%p346) target = $region44
      $region43: #{tpu_custom_call.1} parent=5 // pred_region
        %s349 = ssub.s32 %s17, 2
        // Predicated region
        $region45: #{tpu_custom_call.1} parent=43 // pred_check
          %p350 = pneg %p98
        $region46: #{tpu_custom_call.1} parent=43 // pred_check_branch
          %352 = sbr.rel (%p350) target = $region48
        $region47: #{tpu_custom_call.1} parent=43 // pred_region
          %s353 = sand.u32 %s83, 1
          %s354 = scalar_lea.sflag [#allocation4], %s353
          %s355 = sand.u32 %s83, 1
          %s356 = smul.addr %s355, 256
          %s357 = scalar_lea.vmem [#allocation7], %s356
          %358 = dma.done %s354, 4096
        $region48: #{tpu_custom_call.1} parent=43 // pred_fallthru
          _
      $region44: #{tpu_custom_call.1} parent=5 // pred_fallthru
        _
    $region6: #{tpu_custom_call.1} parent=1 // loop_footer
      %s21 = sadd.s32 1, %s17
    $region7: #{tpu_custom_call.1} parent=1 // loop_footer_branch
      %16 = sbr.rel target = $region3
    $region8: #{tpu_custom_call.1} parent=1 // loop_exit
      _
    %359 = vsyncpa [#allocation3], 1
    %s360 = scalar_lea.sflag [#allocation3], 1
    %361 = vsyncpa %s360, 1
    %362 = vsyncpa [#allocation6], 1
    %s363 = scalar_lea.sflag [#allocation6], 1
    %364 = vsyncpa %s363, 1
    %365 = vsyncpa [#allocation4], 1
    %s366 = scalar_lea.sflag [#allocation4], 1
    %367 = vsyncpa %s366, 1

</llo_original>
